<compile_context>
chip_gen: v5e
topology: v5e:2x2
jax: 0.10.0
libtpu: 0.0.40
codegen_flags: <defaults>
</compile_context>

<pallas_src>
import jax
import jax.numpy as jnp
import numpy as np
from jax import lax
from jax.experimental import pallas as pl
from jax.experimental.pallas import tpu as pltpu

# Fixed Izhikevich parameters (from the PyTorch script).
A_P = 0.0105
B_P = 0.656
C_P = -55.0
D_P = 1.92
THRESH = 30.0
TIME_STEP = 0.1
WEIGHT_SYN = 1.0

TIME_UNROLL = 8  # timesteps per aligned (8, TN) store tile

# Folded per-step constants (dt pre-multiplied).
V_QUAD = 0.04 * TIME_STEP          # 0.004   (coefficient of v^2)
V_LIN = 1.0 + 5.0 * TIME_STEP      # 1.5     (coefficient of v)
V_CONST = 140.0 * TIME_STEP        # 14.0    (constant term)
U_COEF = TIME_STEP                 # 0.1     (coefficient of u in the v update)
U_DECAY = 1.0 - TIME_STEP * A_P    # u_new = U_DECAY * u + U_GAIN * v
U_GAIN = TIME_STEP * A_P * B_P


def izhikevich_kernel(x_ref, state0_ref, w_ref, spk_ref, v_ref, u_ref):
    """Sequential Izhikevich recurrence over time for one lane-dense neuron block.

    x_ref:      (T_pad, TN) VMEM  - input currents (T_pad multiple of 8, TN multiple of 128)
    state0_ref: (3, TN)     VMEM  - initial [v, u, spike]
    w_ref:      (1, 1)      SMEM  - synaptic weight (1x1 linear, bias-free)
    spk_ref:    (T_pad, TN) VMEM  - spikes per timestep
    v_ref:      (T_pad, TN) VMEM  - membrane potential per timestep
    u_ref:      (T_pad, TN) VMEM  - recovery variable per timestep
    """
    t_pad = x_ref.shape[0]
    n_chunks = t_pad // TIME_UNROLL

    w = w_ref[0, 0]
    in_scale = TIME_STEP * w  # fold dt * weight into a single per-input scale

    v0 = state0_ref[0:1, :]  # (1, TN)
    u0 = state0_ref[1:2, :]  # (1, TN)

    def chunk_body(ci, carry):
        v, u = carry
        row0 = pl.multiple_of(ci * TIME_UNROLL, TIME_UNROLL)

        # One aligned (8, TN) input load per chunk; pre-fold dt*w*x + 140*dt.
        x_tile = x_ref[pl.ds(row0, TIME_UNROLL), :] * in_scale + V_CONST

        spk_rows = []
        v_rows = []
        u_rows = []
        for s in range(TIME_UNROLL):  # static unroll: visible to the scheduler
            xi = x_tile[s:s + 1, :]                     # (1, TN)
            v_poly = v * (V_QUAD * v + V_LIN)           # v * (0.004 v + 1.5)
            v_new = v_poly + (xi - U_COEF * u)          # + dt*w*x + 14 - 0.1*u
            u_new = U_DECAY * u + U_GAIN * v
            spiked = v_new > THRESH
            spike = spiked.astype(jnp.float32)
            v = jnp.where(spiked, C_P, v_new)
            u = jnp.where(spiked, u_new + D_P, u_new)
            spk_rows.append(spike)
            v_rows.append(v)
            u_rows.append(u)

        # One aligned, unmasked (8, TN) store per output stream per chunk.
        spk_ref[pl.ds(row0, TIME_UNROLL), :] = jnp.concatenate(spk_rows, axis=0)
        v_ref[pl.ds(row0, TIME_UNROLL), :] = jnp.concatenate(v_rows, axis=0)
        u_ref[pl.ds(row0, TIME_UNROLL), :] = jnp.concatenate(u_rows, axis=0)
        return (v, u)

    lax.fori_loop(0, n_chunks, chunk_body, (v0, u0))


def _round_up(x, m):
    return ((x + m - 1) // m) * m


def _choose_tiles(T, N):
    """Pick time padding and a lane-dense neuron tile that fits a conservative VMEM budget."""
    t_pad = _round_up(max(T, 1), TIME_UNROLL)
    n128 = _round_up(max(N, 1), 128)
    # Per neuron block: 4 f32 (t_pad, tn) streams (input + 3 outputs), double-buffered.
    budget = 24 * 1024 * 1024  # safe for v5e/v6e (128 MiB) and v7x (64 MiB physical VMEM)
    tn = 512
    while tn > 128 and 4 * 2 * 4 * t_pad * tn > budget:
        tn //= 2
    tn = min(tn, n128)
    n_pad = _round_up(n128, tn)
    return t_pad, tn, n_pad


def izhikevich_snn_forward(input_batch, state, weight):
    """JAX wrapper matching Izhikevich_SNN.forward(input_batch, state).

    input_batch: (T, N) float32
    state:       (3, N) float32  ([v, u, spike])
    weight:      (1, 1) float32  (synaptic weight)
    returns:     outputs (T, N), states (T, 3, N)   -- same as torch.stack(outputs)/torch.stack(states)
    """
    T, N = input_batch.shape
    t_pad, tn, n_pad = _choose_tiles(T, N)

    x_p = jnp.pad(input_batch.astype(jnp.float32), ((0, t_pad - T), (0, n_pad - N)))
    state_p = jnp.pad(state.astype(jnp.float32), ((0, 0), (0, n_pad - N)))
    w = jnp.asarray(weight, jnp.float32).reshape(1, 1)

    grid = (n_pad // tn,)
    out_shapes = (
        jax.ShapeDtypeStruct((t_pad, n_pad), jnp.float32),  # spikes
        jax.ShapeDtypeStruct((t_pad, n_pad), jnp.float32),  # v
        jax.ShapeDtypeStruct((t_pad, n_pad), jnp.float32),  # u
    )

    spk, v_all, u_all = pl.pallas_call(
        izhikevich_kernel,
        out_shape=out_shapes,
        grid=grid,
        in_specs=[
            pl.BlockSpec((t_pad, tn), lambda i: (0, i)),            # input currents
            pl.BlockSpec((3, tn), lambda i: (0, i)),                # initial state
            pl.BlockSpec(memory_space=pltpu.MemorySpace.SMEM),      # weight scalar
        ],
        out_specs=(
            pl.BlockSpec((t_pad, tn), lambda i: (0, i)),
            pl.BlockSpec((t_pad, tn), lambda i: (0, i)),
            pl.BlockSpec((t_pad, tn), lambda i: (0, i)),
        ),
        compiler_params=pltpu.CompilerParams(
            dimension_semantics=("parallel",),          # neuron blocks are independent
            vmem_limit_bytes=32 * 1024 * 1024,
        ),
    )(x_p, state_p, w)

    # Slice off padding and restore the PyTorch layouts.
    outputs = spk[:T, :N]
    states = jnp.stack([v_all[:T, :N], u_all[:T, :N], spk[:T, :N]], axis=1)  # (T, 3, N)
    return outputs, states


def _reference(input_batch, state, weight):
    """Pure-JAX reference with the unfolded (PyTorch-order) math."""
    w = jnp.asarray(weight, jnp.float32).reshape(1, 1)[0, 0]
    v = state[0:1, :].astype(jnp.float32)
    u = state[1:2, :].astype(jnp.float32)
    outs, sts = [], []
    for t in range(input_batch.shape[0]):
        I = input_batch[t:t + 1, :].astype(jnp.float32) * w
        v_new = v + TIME_STEP * (0.04 * v * v + 5.0 * v + 140.0 - u + I)
        u_new = u + TIME_STEP * (A_P * (B_P * v - u))
        spike = (v_new - THRESH > 0.0).astype(jnp.float32)
        v = (1.0 - spike) * v_new + spike * C_P
        u = u_new + spike * D_P
        outs.append(spike[0])
        sts.append(jnp.concatenate([v, u, spike], axis=0))
    return jnp.stack(outs), jnp.stack(sts)


if __name__ == "__main__":
    key = jax.random.PRNGKey(0)
    k1, k2 = jax.random.split(key)

    # Module-consistent shapes: seq_length=8, n_inputs = n_outputs = 1, state = zeros(3, 1).
    T, N = 8, 1
    input_batch = 20.0 * jax.random.uniform(k1, (T, N), dtype=jnp.float32)
    state0 = jnp.zeros((3, N), dtype=jnp.float32)
    weight = jnp.full((1, 1), WEIGHT_SYN, jnp.float32)

    outputs, states = izhikevich_snn_forward(input_batch, state0, weight)
    outputs = jax.block_until_ready(outputs)
    states = jax.block_until_ready(states)

    ref_out, ref_states = _reference(input_batch, state0, weight)
    np.testing.assert_allclose(np.asarray(outputs), np.asarray(ref_out), rtol=1e-4, atol=1e-4)
    np.testing.assert_allclose(np.asarray(states), np.asarray(ref_states), rtol=1e-4, atol=1e-4)

    # Second check exercising time padding (T not a multiple of 8) and neuron padding (N < 128).
    T2, N2 = 20, 3
    x2 = 20.0 * jax.random.uniform(k2, (T2, N2), dtype=jnp.float32)
    s2 = jnp.zeros((3, N2), dtype=jnp.float32)
    out2, st2 = izhikevich_snn_forward(x2, s2, weight)
    out2 = jax.block_until_ready(out2)
    st2 = jax.block_until_ready(st2)
    ref_out2, ref_st2 = _reference(x2, s2, weight)
    np.testing.assert_allclose(np.asarray(out2), np.asarray(ref_out2), rtol=1e-4, atol=1e-4)
    np.testing.assert_allclose(np.asarray(st2), np.asarray(ref_st2), rtol=1e-4, atol=1e-4)

    print("KERNEL_OK")
</pallas_src>

<mosaic_0001>
module attributes {stable_mosaic.version = 11 : i64} {
  func.func @izhikevich_kernel(%arg0: i32, %arg1: memref<8x128xf32, #tpu.memory_space<vmem>>, %arg2: memref<3x128xf32, #tpu.memory_space<vmem>>, %arg3: memref<1x1xf32, #tpu.memory_space<smem>>, %arg4: memref<8x128xf32, #tpu.memory_space<vmem>>, %arg5: memref<8x128xf32, #tpu.memory_space<vmem>>, %arg6: memref<8x128xf32, #tpu.memory_space<vmem>>) attributes {dimension_semantics = [#tpu.dimension_semantics<parallel>], iteration_bounds = array<i64: 1>, scalar_prefetch = 0 : i64, scratch_operands = 0 : i64, tpu.core_type = #tpu.core_type<tc>, window_params = [{transform_indices = @transform_0, window_bounds = array<i64: 8, 128>}, {transform_indices = @transform_1, window_bounds = array<i64: 3, 128>}, {transform_indices = @transform_2, window_bounds = array<i64: 1, 1>}, {transform_indices = @transform_3, window_bounds = array<i64: 8, 128>}, {transform_indices = @transform_4, window_bounds = array<i64: 8, 128>}, {transform_indices = @transform_5, window_bounds = array<i64: 8, 128>}]} {
    %c0 = arith.constant 0 : index
    %c0_0 = arith.constant 0 : index
    %0 = memref.load %arg3[%c0, %c0_0] : memref<1x1xf32, #tpu.memory_space<smem>>
    %cst = arith.constant 1.000000e-01 : f32
    %1 = arith.mulf %cst, %0 : f32
    %c0_1 = arith.constant 0 : index
    %c0_2 = arith.constant 0 : index
    %2 = vector.load %arg2[%c0_1, %c0_2] : memref<3x128xf32, #tpu.memory_space<vmem>>, vector<1x128xf32>
    %c1 = arith.constant 1 : index
    %c0_3 = arith.constant 0 : index
    %3 = vector.load %arg2[%c1, %c0_3] : memref<3x128xf32, #tpu.memory_space<vmem>>, vector<1x128xf32>
    %c0_i32 = arith.constant 0 : i32
    %c8_i32 = arith.constant 8 : i32
    %4 = arith.muli %c0_i32, %c8_i32 : i32
    %5 = tpu.assume_multiple %4, 8 : i32
    %6 = arith.index_cast %5 : i32 to index
    %c0_4 = arith.constant 0 : index
    %7 = vector.load %arg1[%6, %c0_4] : memref<8x128xf32, #tpu.memory_space<vmem>>, vector<8x128xf32>
    %8 = vector.broadcast %1 : f32 to vector<8x128xf32>
    %9 = arith.mulf %7, %8 : vector<8x128xf32>
    %cst_5 = arith.constant 1.400000e+01 : f32
    %10 = vector.broadcast %cst_5 : f32 to vector<8x128xf32>
    %11 = arith.addf %9, %10 : vector<8x128xf32>
    %12 = vector.extract_strided_slice %11 {offsets = [0, 0], sizes = [1, 128], strides = [1, 1]} : vector<8x128xf32> to vector<1x128xf32>
    %cst_6 = arith.constant 4.000000e-03 : f32
    %13 = vector.broadcast %cst_6 : f32 to vector<1x128xf32>
    %14 = arith.mulf %13, %2 : vector<1x128xf32>
    %cst_7 = arith.constant 1.500000e+00 : f32
    %15 = vector.broadcast %cst_7 : f32 to vector<1x128xf32>
    %16 = arith.addf %14, %15 : vector<1x128xf32>
    %17 = arith.mulf %2, %16 : vector<1x128xf32>
    %cst_8 = arith.constant 1.000000e-01 : f32
    %18 = vector.broadcast %cst_8 : f32 to vector<1x128xf32>
    %19 = arith.mulf %18, %3 : vector<1x128xf32>
    %20 = arith.subf %12, %19 : vector<1x128xf32>
    %21 = arith.addf %17, %20 : vector<1x128xf32>
    %cst_9 = arith.constant 9.989500e-01 : f32
    %22 = vector.broadcast %cst_9 : f32 to vector<1x128xf32>
    %23 = arith.mulf %22, %3 : vector<1x128xf32>
    %cst_10 = arith.constant 6.888000e-04 : f32
    %24 = vector.broadcast %cst_10 : f32 to vector<1x128xf32>
    %25 = arith.mulf %24, %2 : vector<1x128xf32>
    %26 = arith.addf %23, %25 : vector<1x128xf32>
    %cst_11 = arith.constant 3.000000e+01 : f32
    %27 = vector.broadcast %cst_11 : f32 to vector<1x128xf32>
    %28 = arith.cmpf ogt, %21, %27 : vector<1x128xf32>
    %29 = arith.extui %28 : vector<1x128xi1> to vector<1x128xi32>
    %30 = arith.sitofp %29 : vector<1x128xi32> to vector<1x128xf32>
    %cst_12 = arith.constant -5.500000e+01 : f32
    %31 = vector.broadcast %cst_12 : f32 to vector<1x128xf32>
    %32 = arith.select %28, %31, %21 : vector<1x128xi1>, vector<1x128xf32>
    %cst_13 = arith.constant 1.920000e+00 : f32
    %33 = vector.broadcast %cst_13 : f32 to vector<1x128xf32>
    %34 = arith.addf %26, %33 : vector<1x128xf32>
    %35 = arith.select %28, %34, %26 : vector<1x128xi1>, vector<1x128xf32>
    %36 = vector.extract_strided_slice %11 {offsets = [1, 0], sizes = [1, 128], strides = [1, 1]} : vector<8x128xf32> to vector<1x128xf32>
    %cst_14 = arith.constant 4.000000e-03 : f32
    %37 = vector.broadcast %cst_14 : f32 to vector<1x128xf32>
    %38 = arith.mulf %37, %32 : vector<1x128xf32>
    %cst_15 = arith.constant 1.500000e+00 : f32
    %39 = vector.broadcast %cst_15 : f32 to vector<1x128xf32>
    %40 = arith.addf %38, %39 : vector<1x128xf32>
    %41 = arith.mulf %32, %40 : vector<1x128xf32>
    %cst_16 = arith.constant 1.000000e-01 : f32
    %42 = vector.broadcast %cst_16 : f32 to vector<1x128xf32>
    %43 = arith.mulf %42, %35 : vector<1x128xf32>
    %44 = arith.subf %36, %43 : vector<1x128xf32>
    %45 = arith.addf %41, %44 : vector<1x128xf32>
    %cst_17 = arith.constant 9.989500e-01 : f32
    %46 = vector.broadcast %cst_17 : f32 to vector<1x128xf32>
    %47 = arith.mulf %46, %35 : vector<1x128xf32>
    %cst_18 = arith.constant 6.888000e-04 : f32
    %48 = vector.broadcast %cst_18 : f32 to vector<1x128xf32>
    %49 = arith.mulf %48, %32 : vector<1x128xf32>
    %50 = arith.addf %47, %49 : vector<1x128xf32>
    %cst_19 = arith.constant 3.000000e+01 : f32
    %51 = vector.broadcast %cst_19 : f32 to vector<1x128xf32>
    %52 = arith.cmpf ogt, %45, %51 : vector<1x128xf32>
    %53 = arith.extui %52 : vector<1x128xi1> to vector<1x128xi32>
    %54 = arith.sitofp %53 : vector<1x128xi32> to vector<1x128xf32>
    %cst_20 = arith.constant -5.500000e+01 : f32
    %55 = vector.broadcast %cst_20 : f32 to vector<1x128xf32>
    %56 = arith.select %52, %55, %45 : vector<1x128xi1>, vector<1x128xf32>
    %cst_21 = arith.constant 1.920000e+00 : f32
    %57 = vector.broadcast %cst_21 : f32 to vector<1x128xf32>
    %58 = arith.addf %50, %57 : vector<1x128xf32>
    %59 = arith.select %52, %58, %50 : vector<1x128xi1>, vector<1x128xf32>
    %60 = vector.extract_strided_slice %11 {offsets = [2, 0], sizes = [1, 128], strides = [1, 1]} : vector<8x128xf32> to vector<1x128xf32>
    %cst_22 = arith.constant 4.000000e-03 : f32
    %61 = vector.broadcast %cst_22 : f32 to vector<1x128xf32>
    %62 = arith.mulf %61, %56 : vector<1x128xf32>
    %cst_23 = arith.constant 1.500000e+00 : f32
    %63 = vector.broadcast %cst_23 : f32 to vector<1x128xf32>
    %64 = arith.addf %62, %63 : vector<1x128xf32>
    %65 = arith.mulf %56, %64 : vector<1x128xf32>
    %cst_24 = arith.constant 1.000000e-01 : f32
    %66 = vector.broadcast %cst_24 : f32 to vector<1x128xf32>
    %67 = arith.mulf %66, %59 : vector<1x128xf32>
    %68 = arith.subf %60, %67 : vector<1x128xf32>
    %69 = arith.addf %65, %68 : vector<1x128xf32>
    %cst_25 = arith.constant 9.989500e-01 : f32
    %70 = vector.broadcast %cst_25 : f32 to vector<1x128xf32>
    %71 = arith.mulf %70, %59 : vector<1x128xf32>
    %cst_26 = arith.constant 6.888000e-04 : f32
    %72 = vector.broadcast %cst_26 : f32 to vector<1x128xf32>
    %73 = arith.mulf %72, %56 : vector<1x128xf32>
    %74 = arith.addf %71, %73 : vector<1x128xf32>
    %cst_27 = arith.constant 3.000000e+01 : f32
    %75 = vector.broadcast %cst_27 : f32 to vector<1x128xf32>
    %76 = arith.cmpf ogt, %69, %75 : vector<1x128xf32>
    %77 = arith.extui %76 : vector<1x128xi1> to vector<1x128xi32>
    %78 = arith.sitofp %77 : vector<1x128xi32> to vector<1x128xf32>
    %cst_28 = arith.constant -5.500000e+01 : f32
    %79 = vector.broadcast %cst_28 : f32 to vector<1x128xf32>
    %80 = arith.select %76, %79, %69 : vector<1x128xi1>, vector<1x128xf32>
    %cst_29 = arith.constant 1.920000e+00 : f32
    %81 = vector.broadcast %cst_29 : f32 to vector<1x128xf32>
    %82 = arith.addf %74, %81 : vector<1x128xf32>
    %83 = arith.select %76, %82, %74 : vector<1x128xi1>, vector<1x128xf32>
    %84 = vector.extract_strided_slice %11 {offsets = [3, 0], sizes = [1, 128], strides = [1, 1]} : vector<8x128xf32> to vector<1x128xf32>
    %cst_30 = arith.constant 4.000000e-03 : f32
    %85 = vector.broadcast %cst_30 : f32 to vector<1x128xf32>
    %86 = arith.mulf %85, %80 : vector<1x128xf32>
    %cst_31 = arith.constant 1.500000e+00 : f32
    %87 = vector.broadcast %cst_31 : f32 to vector<1x128xf32>
    %88 = arith.addf %86, %87 : vector<1x128xf32>
    %89 = arith.mulf %80, %88 : vector<1x128xf32>
    %cst_32 = arith.constant 1.000000e-01 : f32
    %90 = vector.broadcast %cst_32 : f32 to vector<1x128xf32>
    %91 = arith.mulf %90, %83 : vector<1x128xf32>
    %92 = arith.subf %84, %91 : vector<1x128xf32>
    %93 = arith.addf %89, %92 : vector<1x128xf32>
    %cst_33 = arith.constant 9.989500e-01 : f32
    %94 = vector.broadcast %cst_33 : f32 to vector<1x128xf32>
    %95 = arith.mulf %94, %83 : vector<1x128xf32>
    %cst_34 = arith.constant 6.888000e-04 : f32
    %96 = vector.broadcast %cst_34 : f32 to vector<1x128xf32>
    %97 = arith.mulf %96, %80 : vector<1x128xf32>
    %98 = arith.addf %95, %97 : vector<1x128xf32>
    %cst_35 = arith.constant 3.000000e+01 : f32
    %99 = vector.broadcast %cst_35 : f32 to vector<1x128xf32>
    %100 = arith.cmpf ogt, %93, %99 : vector<1x128xf32>
    %101 = arith.extui %100 : vector<1x128xi1> to vector<1x128xi32>
    %102 = arith.sitofp %101 : vector<1x128xi32> to vector<1x128xf32>
    %cst_36 = arith.constant -5.500000e+01 : f32
    %103 = vector.broadcast %cst_36 : f32 to vector<1x128xf32>
    %104 = arith.select %100, %103, %93 : vector<1x128xi1>, vector<1x128xf32>
    %cst_37 = arith.constant 1.920000e+00 : f32
    %105 = vector.broadcast %cst_37 : f32 to vector<1x128xf32>
    %106 = arith.addf %98, %105 : vector<1x128xf32>
    %107 = arith.select %100, %106, %98 : vector<1x128xi1>, vector<1x128xf32>
    %108 = vector.extract_strided_slice %11 {offsets = [4, 0], sizes = [1, 128], strides = [1, 1]} : vector<8x128xf32> to vector<1x128xf32>
    %cst_38 = arith.constant 4.000000e-03 : f32
    %109 = vector.broadcast %cst_38 : f32 to vector<1x128xf32>
    %110 = arith.mulf %109, %104 : vector<1x128xf32>
    %cst_39 = arith.constant 1.500000e+00 : f32
    %111 = vector.broadcast %cst_39 : f32 to vector<1x128xf32>
    %112 = arith.addf %110, %111 : vector<1x128xf32>
    %113 = arith.mulf %104, %112 : vector<1x128xf32>
    %cst_40 = arith.constant 1.000000e-01 : f32
    %114 = vector.broadcast %cst_40 : f32 to vector<1x128xf32>
    %115 = arith.mulf %114, %107 : vector<1x128xf32>
    %116 = arith.subf %108, %115 : vector<1x128xf32>
    %117 = arith.addf %113, %116 : vector<1x128xf32>
    %cst_41 = arith.constant 9.989500e-01 : f32
    %118 = vector.broadcast %cst_41 : f32 to vector<1x128xf32>
    %119 = arith.mulf %118, %107 : vector<1x128xf32>
    %cst_42 = arith.constant 6.888000e-04 : f32
    %120 = vector.broadcast %cst_42 : f32 to vector<1x128xf32>
    %121 = arith.mulf %120, %104 : vector<1x128xf32>
    %122 = arith.addf %119, %121 : vector<1x128xf32>
    %cst_43 = arith.constant 3.000000e+01 : f32
    %123 = vector.broadcast %cst_43 : f32 to vector<1x128xf32>
    %124 = arith.cmpf ogt, %117, %123 : vector<1x128xf32>
    %125 = arith.extui %124 : vector<1x128xi1> to vector<1x128xi32>
    %126 = arith.sitofp %125 : vector<1x128xi32> to vector<1x128xf32>
    %cst_44 = arith.constant -5.500000e+01 : f32
    %127 = vector.broadcast %cst_44 : f32 to vector<1x128xf32>
    %128 = arith.select %124, %127, %117 : vector<1x128xi1>, vector<1x128xf32>
    %cst_45 = arith.constant 1.920000e+00 : f32
    %129 = vector.broadcast %cst_45 : f32 to vector<1x128xf32>
    %130 = arith.addf %122, %129 : vector<1x128xf32>
    %131 = arith.select %124, %130, %122 : vector<1x128xi1>, vector<1x128xf32>
    %132 = vector.extract_strided_slice %11 {offsets = [5, 0], sizes = [1, 128], strides = [1, 1]} : vector<8x128xf32> to vector<1x128xf32>
    %cst_46 = arith.constant 4.000000e-03 : f32
    %133 = vector.broadcast %cst_46 : f32 to vector<1x128xf32>
    %134 = arith.mulf %133, %128 : vector<1x128xf32>
    %cst_47 = arith.constant 1.500000e+00 : f32
    %135 = vector.broadcast %cst_47 : f32 to vector<1x128xf32>
    %136 = arith.addf %134, %135 : vector<1x128xf32>
    %137 = arith.mulf %128, %136 : vector<1x128xf32>
    %cst_48 = arith.constant 1.000000e-01 : f32
    %138 = vector.broadcast %cst_48 : f32 to vector<1x128xf32>
    %139 = arith.mulf %138, %131 : vector<1x128xf32>
    %140 = arith.subf %132, %139 : vector<1x128xf32>
    %141 = arith.addf %137, %140 : vector<1x128xf32>
    %cst_49 = arith.constant 9.989500e-01 : f32
    %142 = vector.broadcast %cst_49 : f32 to vector<1x128xf32>
    %143 = arith.mulf %142, %131 : vector<1x128xf32>
    %cst_50 = arith.constant 6.888000e-04 : f32
    %144 = vector.broadcast %cst_50 : f32 to vector<1x128xf32>
    %145 = arith.mulf %144, %128 : vector<1x128xf32>
    %146 = arith.addf %143, %145 : vector<1x128xf32>
    %cst_51 = arith.constant 3.000000e+01 : f32
    %147 = vector.broadcast %cst_51 : f32 to vector<1x128xf32>
    %148 = arith.cmpf ogt, %141, %147 : vector<1x128xf32>
    %149 = arith.extui %148 : vector<1x128xi1> to vector<1x128xi32>
    %150 = arith.sitofp %149 : vector<1x128xi32> to vector<1x128xf32>
    %cst_52 = arith.constant -5.500000e+01 : f32
    %151 = vector.broadcast %cst_52 : f32 to vector<1x128xf32>
    %152 = arith.select %148, %151, %141 : vector<1x128xi1>, vector<1x128xf32>
    %cst_53 = arith.constant 1.920000e+00 : f32
    %153 = vector.broadcast %cst_53 : f32 to vector<1x128xf32>
    %154 = arith.addf %146, %153 : vector<1x128xf32>
    %155 = arith.select %148, %154, %146 : vector<1x128xi1>, vector<1x128xf32>
    %156 = vector.extract_strided_slice %11 {offsets = [6, 0], sizes = [1, 128], strides = [1, 1]} : vector<8x128xf32> to vector<1x128xf32>
    %cst_54 = arith.constant 4.000000e-03 : f32
    %157 = vector.broadcast %cst_54 : f32 to vector<1x128xf32>
    %158 = arith.mulf %157, %152 : vector<1x128xf32>
    %cst_55 = arith.constant 1.500000e+00 : f32
    %159 = vector.broadcast %cst_55 : f32 to vector<1x128xf32>
    %160 = arith.addf %158, %159 : vector<1x128xf32>
    %161 = arith.mulf %152, %160 : vector<1x128xf32>
    %cst_56 = arith.constant 1.000000e-01 : f32
    %162 = vector.broadcast %cst_56 : f32 to vector<1x128xf32>
    %163 = arith.mulf %162, %155 : vector<1x128xf32>
    %164 = arith.subf %156, %163 : vector<1x128xf32>
    %165 = arith.addf %161, %164 : vector<1x128xf32>
    %cst_57 = arith.constant 9.989500e-01 : f32
    %166 = vector.broadcast %cst_57 : f32 to vector<1x128xf32>
    %167 = arith.mulf %166, %155 : vector<1x128xf32>
    %cst_58 = arith.constant 6.888000e-04 : f32
    %168 = vector.broadcast %cst_58 : f32 to vector<1x128xf32>
    %169 = arith.mulf %168, %152 : vector<1x128xf32>
    %170 = arith.addf %167, %169 : vector<1x128xf32>
    %cst_59 = arith.constant 3.000000e+01 : f32
    %171 = vector.broadcast %cst_59 : f32 to vector<1x128xf32>
    %172 = arith.cmpf ogt, %165, %171 : vector<1x128xf32>
    %173 = arith.extui %172 : vector<1x128xi1> to vector<1x128xi32>
    %174 = arith.sitofp %173 : vector<1x128xi32> to vector<1x128xf32>
    %cst_60 = arith.constant -5.500000e+01 : f32
    %175 = vector.broadcast %cst_60 : f32 to vector<1x128xf32>
    %176 = arith.select %172, %175, %165 : vector<1x128xi1>, vector<1x128xf32>
    %cst_61 = arith.constant 1.920000e+00 : f32
    %177 = vector.broadcast %cst_61 : f32 to vector<1x128xf32>
    %178 = arith.addf %170, %177 : vector<1x128xf32>
    %179 = arith.select %172, %178, %170 : vector<1x128xi1>, vector<1x128xf32>
    %180 = vector.extract_strided_slice %11 {offsets = [7, 0], sizes = [1, 128], strides = [1, 1]} : vector<8x128xf32> to vector<1x128xf32>
    %cst_62 = arith.constant 4.000000e-03 : f32
    %181 = vector.broadcast %cst_62 : f32 to vector<1x128xf32>
    %182 = arith.mulf %181, %176 : vector<1x128xf32>
    %cst_63 = arith.constant 1.500000e+00 : f32
    %183 = vector.broadcast %cst_63 : f32 to vector<1x128xf32>
    %184 = arith.addf %182, %183 : vector<1x128xf32>
    %185 = arith.mulf %176, %184 : vector<1x128xf32>
    %cst_64 = arith.constant 1.000000e-01 : f32
    %186 = vector.broadcast %cst_64 : f32 to vector<1x128xf32>
    %187 = arith.mulf %186, %179 : vector<1x128xf32>
    %188 = arith.subf %180, %187 : vector<1x128xf32>
    %189 = arith.addf %185, %188 : vector<1x128xf32>
    %cst_65 = arith.constant 9.989500e-01 : f32
    %190 = vector.broadcast %cst_65 : f32 to vector<1x128xf32>
    %191 = arith.mulf %190, %179 : vector<1x128xf32>
    %cst_66 = arith.constant 6.888000e-04 : f32
    %192 = vector.broadcast %cst_66 : f32 to vector<1x128xf32>
    %193 = arith.mulf %192, %176 : vector<1x128xf32>
    %194 = arith.addf %191, %193 : vector<1x128xf32>
    %cst_67 = arith.constant 3.000000e+01 : f32
    %195 = vector.broadcast %cst_67 : f32 to vector<1x128xf32>
    %196 = arith.cmpf ogt, %189, %195 : vector<1x128xf32>
    %197 = arith.extui %196 : vector<1x128xi1> to vector<1x128xi32>
    %198 = arith.sitofp %197 : vector<1x128xi32> to vector<1x128xf32>
    %cst_68 = arith.constant -5.500000e+01 : f32
    %199 = vector.broadcast %cst_68 : f32 to vector<1x128xf32>
    %200 = arith.select %196, %199, %189 : vector<1x128xi1>, vector<1x128xf32>
    %cst_69 = arith.constant 1.920000e+00 : f32
    %201 = vector.broadcast %cst_69 : f32 to vector<1x128xf32>
    %202 = arith.addf %194, %201 : vector<1x128xf32>
    %203 = arith.select %196, %202, %194 : vector<1x128xi1>, vector<1x128xf32>
    %204 = tpu.concatenate %30, %54, %78, %102, %126, %150, %174, %198 in 0 : vector<1x128xf32>, vector<1x128xf32>, vector<1x128xf32>, vector<1x128xf32>, vector<1x128xf32>, vector<1x128xf32>, vector<1x128xf32>, vector<1x128xf32> -> vector<8x128xf32>
    %205 = arith.index_cast %5 : i32 to index
    %c0_70 = arith.constant 0 : index
    %206 = vector.load %arg4[%205, %c0_70] : memref<8x128xf32, #tpu.memory_space<vmem>>, vector<8x128xf32>
    tpu.vector_store %arg4[%205, %c0_70], %204 {strides = array<i32>} : memref<8x128xf32, #tpu.memory_space<vmem>>, vector<8x128xf32>,
    %207 = tpu.concatenate %32, %56, %80, %104, %128, %152, %176, %200 in 0 : vector<1x128xf32>, vector<1x128xf32>, vector<1x128xf32>, vector<1x128xf32>, vector<1x128xf32>, vector<1x128xf32>, vector<1x128xf32>, vector<1x128xf32> -> vector<8x128xf32>
    %208 = arith.index_cast %5 : i32 to index
    %c0_71 = arith.constant 0 : index
    %209 = vector.load %arg5[%208, %c0_71] : memref<8x128xf32, #tpu.memory_space<vmem>>, vector<8x128xf32>
    tpu.vector_store %arg5[%208, %c0_71], %207 {strides = array<i32>} : memref<8x128xf32, #tpu.memory_space<vmem>>, vector<8x128xf32>,
    %210 = tpu.concatenate %35, %59, %83, %107, %131, %155, %179, %203 in 0 : vector<1x128xf32>, vector<1x128xf32>, vector<1x128xf32>, vector<1x128xf32>, vector<1x128xf32>, vector<1x128xf32>, vector<1x128xf32>, vector<1x128xf32> -> vector<8x128xf32>
    %211 = arith.index_cast %5 : i32 to index
    %c0_72 = arith.constant 0 : index
    %212 = vector.load %arg6[%211, %c0_72] : memref<8x128xf32, #tpu.memory_space<vmem>>, vector<8x128xf32>
    tpu.vector_store %arg6[%211, %c0_72], %210 {strides = array<i32>} : memref<8x128xf32, #tpu.memory_space<vmem>>, vector<8x128xf32>,
    %c1_i32 = arith.constant 1 : i32
    return
  }
  func.func @transform_0(%arg0: i32) -> (i32, i32) {
    %c0_i32 = arith.constant 0 : i32
    %c0_i32_0 = arith.constant 0 : i32
    return %c0_i32, %arg0 : i32, i32
  }
  func.func @transform_1(%arg0: i32) -> (i32, i32) {
    %c0_i32 = arith.constant 0 : i32
    %c0_i32_0 = arith.constant 0 : i32
    return %c0_i32, %arg0 : i32, i32
  }
  func.func @transform_2(%arg0: i32) -> (i32, i32) {
    %c0_i32 = arith.constant 0 : i32
    %c0_i32_0 = arith.constant 0 : i32
    %c0_i32_1 = arith.constant 0 : i32
    return %c0_i32, %c0_i32_0 : i32, i32
  }
  func.func @transform_3(%arg0: i32) -> (i32, i32) {
    %c0_i32 = arith.constant 0 : i32
    %c0_i32_0 = arith.constant 0 : i32
    return %c0_i32, %arg0 : i32, i32
  }
  func.func @transform_4(%arg0: i32) -> (i32, i32) {
    %c0_i32 = arith.constant 0 : i32
    %c0_i32_0 = arith.constant 0 : i32
    return %c0_i32, %arg0 : i32, i32
  }
  func.func @transform_5(%arg0: i32) -> (i32, i32) {
    %c0_i32 = arith.constant 0 : i32
    %c0_i32_0 = arith.constant 0 : i32
    return %c0_i32, %arg0 : i32, i32
  }
}

</mosaic_0001>

<llo_original>
// kernel: tpu_custom_call.1
$region0: #{tpu_custom_call.1}
  #allocation0 [shape = 'u32[]', space=smem, size = 0x4, offset = 0x4, fixed_abs, tag = 'smem constant byte address 0x4 - core index']
  #allocation1 [shape = 'u32[72,128]{1,0:T(1,128)}', space=vmem, size = 0x9000, scoped, tag = 'internal scratch']
  #allocation2 [shape = 'f32[1,1]{1,0:T(1,128)S(6)}', space=smem, size = 0x200, scoped, tag = 'scoped memory for tpu_custom_call.1']
  %s0 = inlined_call_operand.hbm [shape: f32[8,128], index: 0, kind: input, shape index: {}]
  %s1 = inlined_call_operand.hbm [shape: f32[3,128], index: 1, kind: input, shape index: {}]
  %s2 = inlined_call_operand.<no memory space> [shape: f32[1,1], index: 2, kind: input, shape index: {}]
  %s3 = inlined_call_operand.hbm [shape: f32[8,128], index: 3, kind: output, shape index: {0}]
  %s4 = inlined_call_operand.hbm [shape: f32[8,128], index: 4, kind: output, shape index: {1}]
  %s5 = inlined_call_operand.hbm [shape: f32[8,128], index: 5, kind: output, shape index: {2}]
  %6 = xla_tuple %s3, %s4, %s5
  %s7 = sld [smem:[#allocation0]]
  $region46: #{tpu_custom_call.1} parent=0
    _
  %s9 = ssub.s32 1, %s7
  %s10 = scalar_select 0, %s9, %s7
  %11 = sst [smem:[#allocation2]] %s2
  $region1: #{tpu_custom_call.1} parent=0
    #allocation3 [shape = 'u8[4096]{0}', space=vmem, size = 0x1000, scoped, tag = 'input window, operand 0, single buffered']
    #allocation4 [shape = 's32[1]{0}', space=sflag, size = 0x4, scoped, tag = 'scoped memory for tpu_custom_call.1']
    #allocation5 [shape = 's32[1]{0}', space=sflag, size = 0x4, scoped, tag = 'scoped memory for tpu_custom_call.1']
    #allocation6 [shape = 'u8[2048]{0}', space=vmem, size = 0x800, scoped, tag = 'input window, operand 1, single buffered']
    #allocation7 [shape = 's32[1]{0}', space=sflag, size = 0x4, scoped, tag = 'scoped memory for tpu_custom_call.1']
    #allocation8 [shape = 'u8[4096]{0}', space=vmem, size = 0x1000, scoped, tag = 'output window, operand 0, single buffered']
    #allocation9 [shape = 'u8[4096]{0}', space=vmem, size = 0x1000, scoped, tag = 'output window, operand 1, single buffered']
    #allocation10 [shape = 's32[1]{0}', space=sflag, size = 0x4, scoped, tag = 'scoped memory for tpu_custom_call.1']
    #allocation11 [shape = 'u8[4096]{0}', space=vmem, size = 0x1000, scoped, tag = 'output window, operand 2, single buffered']
    %12 = vsyncpa [#allocation4], 0
    %13 = vsyncpa [#allocation7], 0
    %14 = vsyncpa [#allocation5], 0
    %15 = vsyncpa [#allocation10], 0
    // Predicated region
    $region2: #{tpu_custom_call.1} parent=1 // pred_check
      _
    $region3: #{tpu_custom_call.1} parent=1 // pred_check_branch
      %17 = sbr.rel (0) target = $region5
    $region4: #{tpu_custom_call.1} parent=1 // pred_region
      %19 = vsyncadd [#allocation4], 0
      %s21 = sshll.u32 %s0, 4
      %s22 = int_to_ptr.hbm [resolvable:$true] %s21
      %s23 = sshll.u32 [#allocation3], 4
      %s24 = int_to_ptr.vmem [resolvable:$true] %s23
      %26 = dma.hbm_to_vmem [thread:$0]  %s22, 128, %s24, [#allocation4]
    $region5: #{tpu_custom_call.1} parent=1 // pred_fallthru
      _
    // Predicated region
    $region6: #{tpu_custom_call.1} parent=1 // pred_check
      _
    $region7: #{tpu_custom_call.1} parent=1 // pred_check_branch
      %28 = sbr.rel (0) target = $region9
    $region8: #{tpu_custom_call.1} parent=1 // pred_region
      %30 = vsyncadd [#allocation7], 0
      %s32 = sshll.u32 %s1, 4
      %s33 = int_to_ptr.hbm [resolvable:$true] %s32
      %s34 = sshll.u32 [#allocation6], 4
      %s35 = int_to_ptr.vmem [resolvable:$true] %s34
      %37 = dma.hbm_to_vmem [thread:$0]  %s33, 64, %s35, [#allocation7]
    $region9: #{tpu_custom_call.1} parent=1 // pred_fallthru
      _
    // Predicated region
    $region10: #{tpu_custom_call.1} parent=1 // pred_check
      _
    $region11: #{tpu_custom_call.1} parent=1 // pred_check_branch
      %39 = sbr.rel (0) target = $region13
    $region12: #{tpu_custom_call.1} parent=1 // pred_region
      _
    $region13: #{tpu_custom_call.1} parent=1 // pred_fallthru
      _
    // Predicated region
    $region14: #{tpu_custom_call.1} parent=1 // pred_check
      _
    $region15: #{tpu_custom_call.1} parent=1 // pred_check_branch
      %41 = sbr.rel (0) target = $region17
    $region16: #{tpu_custom_call.1} parent=1 // pred_region
      %43 = dma.done [#allocation4], 128
    $region17: #{tpu_custom_call.1} parent=1 // pred_fallthru
      _
    // Predicated region
    $region18: #{tpu_custom_call.1} parent=1 // pred_check
      _
    $region19: #{tpu_custom_call.1} parent=1 // pred_check_branch
      %45 = sbr.rel (0) target = $region21
    $region20: #{tpu_custom_call.1} parent=1 // pred_region
      %47 = dma.done [#allocation7], 64
    $region21: #{tpu_custom_call.1} parent=1 // pred_fallthru
      _
    %s48 = sld [smem:[#allocation2]]
    %s49 = smul.f32 %s48, 0.1
    %v50 = vld [vmem:[#allocation6] sm:$0x1]
    %v51 = vld [vmem:[#allocation6 + $0x1] sm:$0x1]
    %v52 = vld [vmem:[#allocation3] sm:$0xff]
    %v53 = vstv %s49
    %v54 = vmul.f32 %v52, %v53
    %v55 = vadd.f32 %v54, 14.0
    %v56 = vmul.f32 %v50, 0.004
    %v57 = vadd.f32 %v56, 1.5
    %v58 = vmul.f32 %v50, %v57
    %v59 = vmul.f32 %v51, 0.1
    %v60 = vsub.f32 %v55, %v59
    %v61 = vadd.f32 %v58, %v60
    %v62 = vmul.f32 %v51, 0.99895
    %v63 = vmul.f32 %v50, 0.0006888
    %v64 = vadd.f32 %v62, %v63
    %vm65 = vcmp.gt.f32.partialorder %v61, 30.0
    %v66 = vsel %vm65, 1, 0
    %v67 = vcvt.s32.f32 %v66
    %v68 = vsel %vm65, -55.0, %v61
    %v69 = vadd.f32 %v64, 1.92
    %v70 = vsel %vm65, %v69, %v64
    %v71 = vmul.f32 %v68, 0.004
    %v72 = vadd.f32 %v71, 1.5
    %v73 = vmul.f32 %v68, %v72
    %v74 = vmul.f32 %v70, 0.1
    %v76 = vrot.slane %v74, 7
    %v78 = vsub.f32 %v55, %v76
    %v80 = vrot.slane %v78, 1
    %v82 = vadd.f32 %v73, %v80
    %v83 = vmul.f32 %v70, 0.99895
    %v84 = vmul.f32 %v68, 0.0006888
    %v85 = vadd.f32 %v83, %v84
    %vm86 = vcmp.gt.f32.partialorder %v82, 30.0
    %v87 = vsel %vm86, 1, 0
    %v88 = vcvt.s32.f32 %v87
    %v89 = vsel %vm86, -55.0, %v82
    %v90 = vadd.f32 %v85, 1.92
    %v91 = vsel %vm86, %v90, %v85
    %v92 = vmul.f32 %v89, 0.004
    %v93 = vadd.f32 %v92, 1.5
    %v94 = vmul.f32 %v89, %v93
    %v95 = vmul.f32 %v91, 0.1
    %v97 = vrot.slane %v95, 6
    %v99 = vsub.f32 %v55, %v97
    %v101 = vrot.slane %v99, 2
    %v103 = vadd.f32 %v94, %v101
    %v104 = vmul.f32 %v91, 0.99895
    %v105 = vmul.f32 %v89, 0.0006888
    %v106 = vadd.f32 %v104, %v105
    %vm107 = vcmp.gt.f32.partialorder %v103, 30.0
    %v108 = vsel %vm107, 1, 0
    %v109 = vcvt.s32.f32 %v108
    %v110 = vsel %vm107, -55.0, %v103
    %v111 = vadd.f32 %v106, 1.92
    %v112 = vsel %vm107, %v111, %v106
    %v113 = vmul.f32 %v110, 0.004
    %v114 = vadd.f32 %v113, 1.5
    %v115 = vmul.f32 %v110, %v114
    %v116 = vmul.f32 %v112, 0.1
    %v118 = vrot.slane %v116, 5
    %v120 = vsub.f32 %v55, %v118
    %v122 = vrot.slane %v120, 3
    %v124 = vadd.f32 %v115, %v122
    %v125 = vmul.f32 %v112, 0.99895
    %v126 = vmul.f32 %v110, 0.0006888
    %v127 = vadd.f32 %v125, %v126
    %vm128 = vcmp.gt.f32.partialorder %v124, 30.0
    %v129 = vsel %vm128, 1, 0
    %v130 = vcvt.s32.f32 %v129
    %v131 = vsel %vm128, -55.0, %v124
    %v132 = vadd.f32 %v127, 1.92
    %v133 = vsel %vm128, %v132, %v127
    %v134 = vmul.f32 %v131, 0.004
    %v135 = vadd.f32 %v134, 1.5
    %v136 = vmul.f32 %v131, %v135
    %v137 = vmul.f32 %v133, 0.1
    %v139 = vrot.slane %v137, 4
    %v141 = vsub.f32 %v55, %v139
    %v143 = vrot.slane %v141, 4
    %v145 = vadd.f32 %v136, %v143
    %v146 = vmul.f32 %v133, 0.99895
    %v147 = vmul.f32 %v131, 0.0006888
    %v148 = vadd.f32 %v146, %v147
    %vm149 = vcmp.gt.f32.partialorder %v145, 30.0
    %v150 = vsel %vm149, 1, 0
    %v151 = vcvt.s32.f32 %v150
    %v152 = vsel %vm149, -55.0, %v145
    %v153 = vadd.f32 %v148, 1.92
    %v154 = vsel %vm149, %v153, %v148
    %v155 = vmul.f32 %v152, 0.004
    %v156 = vadd.f32 %v155, 1.5
    %v157 = vmul.f32 %v152, %v156
    %v158 = vmul.f32 %v154, 0.1
    %v160 = vrot.slane %v158, 3
    %v162 = vsub.f32 %v55, %v160
    %v164 = vrot.slane %v162, 5
    %v166 = vadd.f32 %v157, %v164
    %v167 = vmul.f32 %v154, 0.99895
    %v168 = vmul.f32 %v152, 0.0006888
    %v169 = vadd.f32 %v167, %v168
    %vm170 = vcmp.gt.f32.partialorder %v166, 30.0
    %v171 = vsel %vm170, 1, 0
    %v172 = vcvt.s32.f32 %v171
    %v173 = vsel %vm170, -55.0, %v166
    %v174 = vadd.f32 %v169, 1.92
    %v175 = vsel %vm170, %v174, %v169
    %v176 = vmul.f32 %v173, 0.004
    %v177 = vadd.f32 %v176, 1.5
    %v178 = vmul.f32 %v173, %v177
    %v179 = vmul.f32 %v175, 0.1
    %v181 = vrot.slane %v179, 2
    %v183 = vsub.f32 %v55, %v181
    %v185 = vrot.slane %v183, 6
    %v187 = vadd.f32 %v178, %v185
    %v188 = vmul.f32 %v175, 0.99895
    %v189 = vmul.f32 %v173, 0.0006888
    %v190 = vadd.f32 %v188, %v189
    %vm191 = vcmp.gt.f32.partialorder %v187, 30.0
    %v192 = vsel %vm191, 1, 0
    %v193 = vcvt.s32.f32 %v192
    %v194 = vsel %vm191, -55.0, %v187
    %v195 = vadd.f32 %v190, 1.92
    %v196 = vsel %vm191, %v195, %v190
    %v197 = vmul.f32 %v194, 0.004
    %v198 = vadd.f32 %v197, 1.5
    %v199 = vmul.f32 %v194, %v198
    %v200 = vmul.f32 %v196, 0.1
    %v202 = vrot.slane %v200, 1
    %v204 = vsub.f32 %v55, %v202
    %v206 = vrot.slane %v204, 7
    %v208 = vadd.f32 %v199, %v206
    %v209 = vmul.f32 %v196, 0.99895
    %v210 = vmul.f32 %v194, 0.0006888
    %v211 = vadd.f32 %v209, %v210
    %vm212 = vcmp.gt.f32.partialorder %v208, 30.0
    %v213 = vsel %vm212, 1, 0
    %v214 = vcvt.s32.f32 %v213
    %v215 = vsel %vm212, -55.0, %v208
    %v216 = vadd.f32 %v211, 1.92
    %v217 = vsel %vm212, %v216, %v211
    %v219 = vrot.slane %v88, 7
    %v222 = vrot.slane %v109, 6
    %v225 = vrot.slane %v130, 5
    %v228 = vrot.slane %v151, 4
    %v231 = vrot.slane %v172, 3
    %v234 = vrot.slane %v193, 2
    %v237 = vrot.slane %v214, 1
    %vm239 = vcmask 1040384
    %v240 = vsel %vm239, %v67, %v219
    %vm241 = vcmask 1041408
    %v242 = vsel %vm241, %v240, %v222
    %vm243 = vcmask 1042432
    %v244 = vsel %vm243, %v242, %v225
    %vm245 = vcmask 1043456
    %v246 = vsel %vm245, %v244, %v228
    %vm247 = vcmask 1044480
    %v248 = vsel %vm247, %v246, %v231
    %vm249 = vcmask 1045504
    %v250 = vsel %vm249, %v248, %v234
    %vm251 = vcmask 1046528
    %v252 = vsel %vm251, %v250, %v237
    %253 = vst [vmem:[#allocation8] sm:$0xff] %v252
    %v255 = vrot.slane %v89, 7
    %v258 = vrot.slane %v110, 6
    %v261 = vrot.slane %v131, 5
    %v264 = vrot.slane %v152, 4
    %v267 = vrot.slane %v173, 3
    %v270 = vrot.slane %v194, 2
    %v273 = vrot.slane %v215, 1
    %v275 = vsel %vm239, %v68, %v255
    %v276 = vsel %vm241, %v275, %v258
    %v277 = vsel %vm243, %v276, %v261
    %v278 = vsel %vm245, %v277, %v264
    %v279 = vsel %vm247, %v278, %v267
    %v280 = vsel %vm249, %v279, %v270
    %v281 = vsel %vm251, %v280, %v273
    %282 = vst [vmem:[#allocation9] sm:$0xff] %v281
    %v284 = vrot.slane %v91, 7
    %v287 = vrot.slane %v112, 6
    %v290 = vrot.slane %v133, 5
    %v293 = vrot.slane %v154, 4
    %v296 = vrot.slane %v175, 3
    %v299 = vrot.slane %v196, 2
    %v302 = vrot.slane %v217, 1
    %v304 = vsel %vm239, %v70, %v284
    %v305 = vsel %vm241, %v304, %v287
    %v306 = vsel %vm243, %v305, %v290
    %v307 = vsel %vm245, %v306, %v293
    %v308 = vsel %vm247, %v307, %v296
    %v309 = vsel %vm249, %v308, %v299
    %v310 = vsel %vm251, %v309, %v302
    %311 = vst [vmem:[#allocation11] sm:$0xff] %v310
    // Predicated region
    $region22: #{tpu_custom_call.1} parent=1 // pred_check
      _
    $region23: #{tpu_custom_call.1} parent=1 // pred_check_branch
      %313 = sbr.rel (0) target = $region25
    $region24: #{tpu_custom_call.1} parent=1 // pred_region
      %315 = vsyncadd [#allocation5], 0
      %s317 = sshll.u32 [#allocation8], 4
      %s318 = int_to_ptr.vmem [resolvable:$true] %s317
      %s319 = sshll.u32 %s3, 4
      %s320 = int_to_ptr.hbm [resolvable:$true] %s319
      %322 = dma.vmem_to_hbm [thread:$0]  %s318, 128, %s320, [#allocation5]
    $region25: #{tpu_custom_call.1} parent=1 // pred_fallthru
      _
    // Predicated region
    $region26: #{tpu_custom_call.1} parent=1 // pred_check
      _
    $region27: #{tpu_custom_call.1} parent=1 // pred_check_branch
      %324 = sbr.rel (0) target = $region29
    $region28: #{tpu_custom_call.1} parent=1 // pred_region
      %326 = vsyncadd [#allocation10], 0
      %s328 = sshll.u32 [#allocation9], 4
      %s329 = int_to_ptr.vmem [resolvable:$true] %s328
      %s330 = sshll.u32 %s4, 4
      %s331 = int_to_ptr.hbm [resolvable:$true] %s330
      %333 = dma.vmem_to_hbm [thread:$0]  %s329, 128, %s331, [#allocation10]
    $region29: #{tpu_custom_call.1} parent=1 // pred_fallthru
      _
    // Predicated region
    $region30: #{tpu_custom_call.1} parent=1 // pred_check
      _
    $region31: #{tpu_custom_call.1} parent=1 // pred_check_branch
      %335 = sbr.rel (0) target = $region33
    $region32: #{tpu_custom_call.1} parent=1 // pred_region
      %337 = vsyncadd [#allocation10], 0
      %s339 = sshll.u32 [#allocation11], 4
      %s340 = int_to_ptr.vmem [resolvable:$true] %s339
      %s341 = sshll.u32 %s5, 4
      %s342 = int_to_ptr.hbm [resolvable:$true] %s341
      %344 = dma.vmem_to_hbm [thread:$0]  %s340, 128, %s342, [#allocation10]
    $region33: #{tpu_custom_call.1} parent=1 // pred_fallthru
      _
    // Predicated region
    $region34: #{tpu_custom_call.1} parent=1 // pred_check
      _
    $region35: #{tpu_custom_call.1} parent=1 // pred_check_branch
      %346 = sbr.rel (0) target = $region37
    $region36: #{tpu_custom_call.1} parent=1 // pred_region
      %348 = dma.done [#allocation5], 128
    $region37: #{tpu_custom_call.1} parent=1 // pred_fallthru
      _
    // Predicated region
    $region38: #{tpu_custom_call.1} parent=1 // pred_check
      _
    $region39: #{tpu_custom_call.1} parent=1 // pred_check_branch
      %350 = sbr.rel (0) target = $region41
    $region40: #{tpu_custom_call.1} parent=1 // pred_region
      %352 = dma.done [#allocation10], 128
    $region41: #{tpu_custom_call.1} parent=1 // pred_fallthru
      _
    // Predicated region
    $region42: #{tpu_custom_call.1} parent=1 // pred_check
      _
    $region43: #{tpu_custom_call.1} parent=1 // pred_check_branch
      %354 = sbr.rel (0) target = $region45
    $region44: #{tpu_custom_call.1} parent=1 // pred_region
      %356 = dma.done [#allocation10], 128
    $region45: #{tpu_custom_call.1} parent=1 // pred_fallthru
      _
    %357 = vsyncpa [#allocation4], 1
    %358 = vsyncpa [#allocation7], 1
    %359 = vsyncpa [#allocation5], 1
    %360 = vsyncpa [#allocation10], 1

</llo_original>
